<compile_context>
chip_gen: v6e
topology: v6e:2x2x1
jax: 0.10.0
libtpu: 0.0.40
codegen_flags: <defaults>
</compile_context>

<pallas_src>
import math
import jax
import jax.numpy as jnp
from jax.experimental import pallas as pl
from jax.experimental.pallas import tpu as pltpu


# ----------------------------------------------------------------------------
# Pallas kernel: masked pooling + mm-feature build + anomaly MLP + L2-normalize
# ----------------------------------------------------------------------------
def anomaly_head_kernel(code_h_ref, text_h_ref, code_m_ref, text_m_ref,
                        wc_ref, wt_ref, b1_ref, w2_ref, b2_ref,
                        code_out_ref, text_out_ref, mm_out_ref, anom_out_ref):
    H = code_out_ref.shape[1]

    cm = code_m_ref[...]                                   # (Bt, S) bf16, exact 0/1
    tm = text_m_ref[...]                                   # (Bt, S) bf16

    # Masked sums with f32 accumulation.  The multiply stays bf16 (exact,
    # mask is 0/1) so no full-tile f32 copy of the hidden states is created;
    # the reduction upcasts per-vreg into an f32 accumulator.
    code_sum = jnp.sum(code_h_ref[...] * cm[:, :, None], axis=1,
                       dtype=jnp.float32)                  # (Bt, H)
    text_sum = jnp.sum(text_h_ref[...] * tm[:, :, None], axis=1,
                       dtype=jnp.float32)                  # (Bt, H)

    # Token counts accumulated in f32 (exact) and EXACT division — mirrors
    # `(feat * mask[:,:,None]).sum(1) / mask.sum(-1)[:,None]` (no epsilon,
    # no approximate reciprocal).
    code_cnt = jnp.sum(cm, axis=-1, keepdims=True, dtype=jnp.float32)
    text_cnt = jnp.sum(tm, axis=-1, keepdims=True, dtype=jnp.float32)
    code_feat = code_sum / code_cnt                        # (Bt, H)
    text_feat = text_sum / text_cnt                        # (Bt, H)

    # mm_features = cat([code, text, text - code, text + code], dim=1)
    # Four contiguous slabs; lane-dense (unmasked vst) whenever H % 128 == 0
    # (true for the real model's H=768 and for the demo H=128).
    mm_out_ref[:, 0:H] = code_feat
    mm_out_ref[:, H:2 * H] = text_feat
    mm_out_ref[:, 2 * H:3 * H] = text_feat - code_feat
    mm_out_ref[:, 3 * H:4 * H] = text_feat + code_feat

    # anomaly head: Linear(4H -> H//2) -> Tanh -> Linear(H//2 -> 1)
    # The 4-way concat is folded into precombined weights:
    #   mm @ W1 == code_feat @ W_code + text_feat @ W_text
    # TODO(synk): nn.Dropout(p=0.1) between the layers is skipped (eval-mode identity).
    h = jnp.tanh(jnp.dot(code_feat, wc_ref[...], preferred_element_type=jnp.float32)
                 + jnp.dot(text_feat, wt_ref[...], preferred_element_type=jnp.float32)
                 + b1_ref[...])                            # (Bt, H//2)

    # N=1 second linear on the VPU (a full MXU push for one output lane is wasted).
    logit = jnp.sum(h * w2_ref[...], axis=-1, keepdims=True) + b2_ref[...]   # (Bt, 1)
    # Lane-dense padded store (Bt, 128); the wrapper slices column 0.
    anom_out_ref[...] = jnp.broadcast_to(logit, anom_out_ref.shape)

    # L2-normalize pooled features with exact sqrt + divide
    # (matches x / x.norm(dim=1, keepdim=True); no epsilon, as in PyTorch).
    code_out_ref[...] = code_feat / jnp.sqrt(
        jnp.sum(code_feat * code_feat, axis=1, keepdims=True))
    text_out_ref[...] = text_feat / jnp.sqrt(
        jnp.sum(text_feat * text_feat, axis=1, keepdims=True))


# ----------------------------------------------------------------------------
# Generation-aware VMEM budgeting and batch-tile selection
# ----------------------------------------------------------------------------
def _vmem_capacity_bytes():
    try:
        return int(pltpu.get_tpu_info().vmem_capacity_bytes)   # 64 MiB v7x, 128 MiB v5e/v6e
    except Exception:
        return 64 << 20        # conservative fallback (safe on every generation)


def _pick_batch_tile(B, S, H, budget_bytes):
    """Largest divisor of B whose full per-step VMEM footprint fits the budget.

    Per batch row (bytes), counting everything that can be live:
      * 2 bf16 hidden streams x 2 pipeline buffers:            8*S*H
      * in-kernel temporaries (bf16 mask broadcast + bf16
        product + possible f32 convert, both streams):        16*S*H
      * f32 outputs x 2 buffers + small f32 feature temps:    ~112*H
    Prefers sublane-aligned tiles (Bt % 8 == 0) that leave >= 2 grid steps so
    the batch axis shards across both TensorCores on v7x.
    """
    per_row = 24 * S * H + 8 * S + 112 * H + 1024
    cap = max(1, budget_bytes // per_row)
    divisors = [d for d in range(1, B + 1) if B % d == 0]
    candidates = [d for d in divisors if d <= cap] or [min(divisors)]
    for ok in (lambda d: d % 8 == 0 and B // d >= 2,   # aligned, >=2 grid steps (megacore)
               lambda d: d % 8 == 0,                   # aligned
               lambda d: d == B,                       # block == full array dim
               lambda d: True):
        sel = [d for d in candidates if ok(d)]
        if sel:
            return max(sel)
    return B


def prepare_head_params(w1, b1, w2, b2):
    """One-time weight prep (hoisted out of the per-forward path):
    fold the 4-way concat into the first linear,
      mm @ W1 = c @ (W1[0:H] - W1[2H:3H] + W1[3H:4H])
              + t @ (W1[H:2H] + W1[2H:3H] + W1[3H:4H])
    and pre-transpose the N=1 second linear for the VPU dot."""
    H = w1.shape[0] // 4
    return {
        "w_code": w1[0:H] - w1[2 * H:3 * H] + w1[3 * H:4 * H],
        "w_text": w1[H:2 * H] + w1[2 * H:3 * H] + w1[3 * H:4 * H],
        "b1": b1.reshape(1, -1),
        "w2_row": w2.T,                    # (1, H//2)
        "b2": b2.reshape(1, 1),
    }


def anomaly_head(code_hidden, text_hidden, code_mask, text_mask, head):
    B, S, H = code_hidden.shape
    Hh = head["w_code"].shape[1]           # H // 2

    vmem_cap = _vmem_capacity_bytes()
    usable = max(32 << 20, vmem_cap - (16 << 20))      # leave Mosaic scratch headroom
    Bt = _pick_batch_tile(B, S, H, int(usable * 0.8))
    grid = (B // Bt,)

    # bf16 hidden states halve the dominant HBM read traffic; bf16 masks are
    # exact 0/1 so pooling numerics only differ through the hidden-state cast.
    code_hidden = code_hidden.astype(jnp.bfloat16)
    text_hidden = text_hidden.astype(jnp.bfloat16)
    code_mask = code_mask.astype(jnp.bfloat16)
    text_mask = text_mask.astype(jnp.bfloat16)

    hid_spec = pl.BlockSpec((Bt, S, H), lambda i: (i, 0, 0))
    mask_spec = pl.BlockSpec((Bt, S), lambda i: (i, 0))
    # Constant-index specs: head weights DMA'd once, VMEM-resident across steps
    # (their (small) double-buffered footprint is covered by the headroom).
    const2 = lambda shape: pl.BlockSpec(shape, lambda i: (0, 0))

    out_shape = (
        jax.ShapeDtypeStruct((B, H), jnp.float32),        # normalized code features
        jax.ShapeDtypeStruct((B, H), jnp.float32),        # normalized text features
        jax.ShapeDtypeStruct((B, 4 * H), jnp.float32),    # mm_features
        jax.ShapeDtypeStruct((B, 128), jnp.float32),      # anomaly logit, lane-padded
    )
    out_specs = (
        pl.BlockSpec((Bt, H), lambda i: (i, 0)),
        pl.BlockSpec((Bt, H), lambda i: (i, 0)),
        pl.BlockSpec((Bt, 4 * H), lambda i: (i, 0)),
        pl.BlockSpec((Bt, 128), lambda i: (i, 0)),
    )

    fn = pl.pallas_call(
        anomaly_head_kernel,
        out_shape=out_shape,
        grid=grid,
        in_specs=[hid_spec, hid_spec, mask_spec, mask_spec,
                  const2((H, Hh)), const2((H, Hh)), const2((1, Hh)),
                  const2((1, Hh)), const2((1, 1))],
        out_specs=out_specs,
        compiler_params=pltpu.CompilerParams(
            dimension_semantics=("parallel",),
            vmem_limit_bytes=int(usable)),
    )
    code_n, text_n, mm, anom_pad = fn(
        code_hidden, text_hidden, code_mask, text_mask,
        head["w_code"], head["w_text"], head["b1"], head["w2_row"], head["b2"])
    return (code_n, text_n), mm, anom_pad[:, 0]           # squeeze(-1)


# ----------------------------------------------------------------------------
# Deterministic parameter init (mirrors LinearLayer._init_weights:
# xavier_uniform weights, zero bias).
# ----------------------------------------------------------------------------
def xavier_uniform(key, fan_in, fan_out):
    bound = math.sqrt(6.0 / (fan_in + fan_out))
    # PyTorch Linear weight is (out, in); we store the transposed (in, out) so
    # the kernel can do  y = x @ W + b.
    return jax.random.uniform(key, (fan_in, fan_out), jnp.float32, -bound, bound)


# ----------------------------------------------------------------------------
# Stand-in encoder (plain JAX glue).
# TODO(synk): the pretrained RobertaModel encoder cannot be reproduced in-script
# (no checkpoint); a deterministic single-layer toy transformer producing
# (B, S, H) hidden states is used instead.
# ----------------------------------------------------------------------------
def make_encoder_params(key, vocab, H):
    ks = jax.random.split(key, 7)
    return {
        "emb": jax.random.normal(ks[0], (vocab, H), jnp.float32) * 0.02,
        "wq": xavier_uniform(ks[1], H, H),
        "wk": xavier_uniform(ks[2], H, H),
        "wv": xavier_uniform(ks[3], H, H),
        "wo": xavier_uniform(ks[4], H, H),
        "wf1": xavier_uniform(ks[5], H, 2 * H),
        "wf2": xavier_uniform(ks[6], 2 * H, H),
    }


def toy_encoder(params, tokens, mask):
    H = params["emb"].shape[1]
    x = params["emb"][tokens]                              # (B, S, H)
    q = x @ params["wq"]
    k = x @ params["wk"]
    v = x @ params["wv"]
    scores = (q @ jnp.swapaxes(k, -1, -2)) / math.sqrt(H)  # (B, S, S)
    scores = jnp.where(mask[:, None, :] > 0, scores, -1e9)
    attn = jax.nn.softmax(scores, axis=-1)
    x = x + (attn @ v) @ params["wo"]
    x = x + jnp.tanh(x @ params["wf1"]) @ params["wf2"]
    return x


# ----------------------------------------------------------------------------
# Full forward (matches AnomalyDetectionModel.forward semantics)
# ----------------------------------------------------------------------------
def anomaly_detection_forward(enc_params, head, code, text):
    code_mask = (code != 1).astype(jnp.float32)   # code.ne(1)  (pad id = 1)
    text_mask = (text != 1).astype(jnp.float32)
    code_hidden = toy_encoder(enc_params, code, code_mask)
    text_hidden = toy_encoder(enc_params, text, text_mask)
    return anomaly_head(code_hidden, text_hidden, code_mask, text_mask, head)


if __name__ == "__main__":
    # Small shapes consistent with the module; H is a multiple of 128 so all
    # kernel stores are lane-dense.  Head: Linear(4H -> H//2) -> Tanh ->
    # [Dropout] -> Linear(H//2 -> 1).
    B, S, H, VOCAB = 2, 8, 128, 50
    key = jax.random.PRNGKey(0)
    k_enc, k_w1, k_w2, k_code, k_text = jax.random.split(key, 5)

    enc_params = make_encoder_params(k_enc, VOCAB, H)

    # anom_class parameters (LinearLayer((4H, H//2, 1))): xavier weights, zero bias.
    # Weight precombination is done once here, outside the per-forward path.
    head_params = prepare_head_params(
        xavier_uniform(k_w1, 4 * H, H // 2),
        jnp.zeros((H // 2,), jnp.float32),
        xavier_uniform(k_w2, H // 2, 1),
        jnp.zeros((1,), jnp.float32),
    )
    # NOTE: self.code_info / self.text_info are defined in __init__ but unused
    # in forward(), so they are not materialized here.

    # token ids in [2, VOCAB); pad (id == 1) on the last positions
    code = jax.random.randint(k_code, (B, S), 2, VOCAB, dtype=jnp.int32)
    text = jax.random.randint(k_text, (B, S), 2, VOCAB, dtype=jnp.int32)
    code = code.at[:, -2:].set(1)
    text = text.at[:, -1:].set(1)

    (code_n, text_n), mm_features, anom = anomaly_detection_forward(
        enc_params, head_params, code, text)
    jax.block_until_ready((code_n, text_n, mm_features, anom))

    assert code_n.shape == (B, H) and text_n.shape == (B, H)
    assert mm_features.shape == (B, 4 * H)
    assert anom.shape == (B,)
    print("KERNEL_OK")
</pallas_src>

<mosaic_0001>
module attributes {stable_mosaic.version = 11 : i64} {
  func.func @anomaly_head_kernel(%arg0: i32, %arg1: memref<2x8x128xbf16, #tpu.memory_space<vmem>>, %arg2: memref<2x8x128xbf16, #tpu.memory_space<vmem>>, %arg3: memref<2x8xbf16, #tpu.memory_space<vmem>>, %arg4: memref<2x8xbf16, #tpu.memory_space<vmem>>, %arg5: memref<128x64xf32, #tpu.memory_space<vmem>>, %arg6: memref<128x64xf32, #tpu.memory_space<vmem>>, %arg7: memref<1x64xf32, #tpu.memory_space<vmem>>, %arg8: memref<1x64xf32, #tpu.memory_space<vmem>>, %arg9: memref<1x1xf32, #tpu.memory_space<vmem>>, %arg10: memref<2x128xf32, #tpu.memory_space<vmem>>, %arg11: memref<2x128xf32, #tpu.memory_space<vmem>>, %arg12: memref<2x512xf32, #tpu.memory_space<vmem>>, %arg13: memref<2x128xf32, #tpu.memory_space<vmem>>) attributes {dimension_semantics = [#tpu.dimension_semantics<parallel>], iteration_bounds = array<i64: 1>, scalar_prefetch = 0 : i64, scratch_operands = 0 : i64, tpu.core_type = #tpu.core_type<tc>, window_params = [{transform_indices = @transform_0, window_bounds = array<i64: 2, 8, 128>}, {transform_indices = @transform_1, window_bounds = array<i64: 2, 8, 128>}, {transform_indices = @transform_2, window_bounds = array<i64: 2, 8>}, {transform_indices = @transform_3, window_bounds = array<i64: 2, 8>}, {pipeline_mode = #tpu.pipeline_mode<synchronous>, transform_indices = @transform_4, window_bounds = array<i64: 128, 64>}, {pipeline_mode = #tpu.pipeline_mode<synchronous>, transform_indices = @transform_5, window_bounds = array<i64: 128, 64>}, {pipeline_mode = #tpu.pipeline_mode<synchronous>, transform_indices = @transform_6, window_bounds = array<i64: 1, 64>}, {pipeline_mode = #tpu.pipeline_mode<synchronous>, transform_indices = @transform_7, window_bounds = array<i64: 1, 64>}, {pipeline_mode = #tpu.pipeline_mode<synchronous>, transform_indices = @transform_8, window_bounds = array<i64: 1, 1>}, {transform_indices = @transform_9, window_bounds = array<i64: 2, 128>}, {transform_indices = @transform_10, window_bounds = array<i64: 2, 128>}, {transform_indices = @transform_11, window_bounds = array<i64: 2, 512>}, {transform_indices = @transform_12, window_bounds = array<i64: 2, 128>}]} {
    %c0 = arith.constant 0 : index
    %c0_0 = arith.constant 0 : index
    %0 = vector.load %arg3[%c0, %c0_0] : memref<2x8xbf16, #tpu.memory_space<vmem>>, vector<2x8xbf16>
    %c0_1 = arith.constant 0 : index
    %c0_2 = arith.constant 0 : index
    %1 = vector.load %arg4[%c0_1, %c0_2] : memref<2x8xbf16, #tpu.memory_space<vmem>>, vector<2x8xbf16>
    %c0_3 = arith.constant 0 : index
    %c0_4 = arith.constant 0 : index
    %c0_5 = arith.constant 0 : index
    %2 = vector.load %arg1[%c0_3, %c0_4, %c0_5] : memref<2x8x128xbf16, #tpu.memory_space<vmem>>, vector<2x8x128xbf16>
    %3 = vector.shape_cast %0 : vector<2x8xbf16> to vector<2x8x1xbf16>
    %4 = vector.broadcast %3 : vector<2x8x1xbf16> to vector<2x8x128xbf16>
    %5 = arith.mulf %2, %4 : vector<2x8x128xbf16>
    %6 = arith.extf %5 : vector<2x8x128xbf16> to vector<2x8x128xf32>
    %cst = arith.constant dense<0.000000e+00> : vector<2x128xf32>
    %7 = vector.multi_reduction <add>, %6, %cst [1] : vector<2x8x128xf32> to vector<2x128xf32>
    %c0_6 = arith.constant 0 : index
    %c0_7 = arith.constant 0 : index
    %c0_8 = arith.constant 0 : index
    %8 = vector.load %arg2[%c0_6, %c0_7, %c0_8] : memref<2x8x128xbf16, #tpu.memory_space<vmem>>, vector<2x8x128xbf16>
    %9 = vector.shape_cast %1 : vector<2x8xbf16> to vector<2x8x1xbf16>
    %10 = vector.broadcast %9 : vector<2x8x1xbf16> to vector<2x8x128xbf16>
    %11 = arith.mulf %8, %10 : vector<2x8x128xbf16>
    %12 = arith.extf %11 : vector<2x8x128xbf16> to vector<2x8x128xf32>
    %cst_9 = arith.constant dense<0.000000e+00> : vector<2x128xf32>
    %13 = vector.multi_reduction <add>, %12, %cst_9 [1] : vector<2x8x128xf32> to vector<2x128xf32>
    %14 = arith.extf %0 : vector<2x8xbf16> to vector<2x8xf32>
    %cst_10 = arith.constant dense<0.000000e+00> : vector<2xf32>
    %15 = vector.multi_reduction <add>, %14, %cst_10 [1] : vector<2x8xf32> to vector<2xf32>
    %16 = vector.shape_cast %15 : vector<2xf32> to vector<2x1xf32>
    %17 = arith.extf %1 : vector<2x8xbf16> to vector<2x8xf32>
    %cst_11 = arith.constant dense<0.000000e+00> : vector<2xf32>
    %18 = vector.multi_reduction <add>, %17, %cst_11 [1] : vector<2x8xf32> to vector<2xf32>
    %19 = vector.shape_cast %18 : vector<2xf32> to vector<2x1xf32>
    %20 = vector.broadcast %16 : vector<2x1xf32> to vector<2x128xf32>
    %21 = arith.divf %7, %20 : vector<2x128xf32>
    %22 = vector.broadcast %19 : vector<2x1xf32> to vector<2x128xf32>
    %23 = arith.divf %13, %22 : vector<2x128xf32>
    %c0_12 = arith.constant 0 : index
    %c0_13 = arith.constant 0 : index
    %24 = vector.load %arg12[%c0_12, %c0_13] : memref<2x512xf32, #tpu.memory_space<vmem>>, vector<2x128xf32>
    tpu.vector_store %arg12[%c0_12, %c0_13], %21 {strides = array<i32>} : memref<2x512xf32, #tpu.memory_space<vmem>>, vector<2x128xf32>,
    %c0_14 = arith.constant 0 : index
    %c128 = arith.constant 128 : index
    %25 = vector.load %arg12[%c0_14, %c128] : memref<2x512xf32, #tpu.memory_space<vmem>>, vector<2x128xf32>
    tpu.vector_store %arg12[%c0_14, %c128], %23 {strides = array<i32>} : memref<2x512xf32, #tpu.memory_space<vmem>>, vector<2x128xf32>,
    %26 = arith.subf %23, %21 : vector<2x128xf32>
    %c0_15 = arith.constant 0 : index
    %c256 = arith.constant 256 : index
    %27 = vector.load %arg12[%c0_15, %c256] : memref<2x512xf32, #tpu.memory_space<vmem>>, vector<2x128xf32>
    tpu.vector_store %arg12[%c0_15, %c256], %26 {strides = array<i32>} : memref<2x512xf32, #tpu.memory_space<vmem>>, vector<2x128xf32>,
    %28 = arith.addf %23, %21 : vector<2x128xf32>
    %c0_16 = arith.constant 0 : index
    %c384 = arith.constant 384 : index
    %29 = vector.load %arg12[%c0_16, %c384] : memref<2x512xf32, #tpu.memory_space<vmem>>, vector<2x128xf32>
    tpu.vector_store %arg12[%c0_16, %c384], %28 {strides = array<i32>} : memref<2x512xf32, #tpu.memory_space<vmem>>, vector<2x128xf32>,
    %c0_17 = arith.constant 0 : index
    %c0_18 = arith.constant 0 : index
    %30 = vector.load %arg5[%c0_17, %c0_18] : memref<128x64xf32, #tpu.memory_space<vmem>>, vector<128x64xf32>
    %cst_19 = arith.constant dense<0.000000e+00> : vector<2x64xf32>
    %31 = tpu.matmul %21, %30, %cst_19 {dimension_numbers = #tpu.dot_dimension_numbers<[1], [0], [0], [1], [0, 0, 1, 1], [], []>} : vector<2x128xf32>, vector<128x64xf32>, vector<2x64xf32> -> vector<2x64xf32>
    %c0_20 = arith.constant 0 : index
    %c0_21 = arith.constant 0 : index
    %32 = vector.load %arg6[%c0_20, %c0_21] : memref<128x64xf32, #tpu.memory_space<vmem>>, vector<128x64xf32>
    %cst_22 = arith.constant dense<0.000000e+00> : vector<2x64xf32>
    %33 = tpu.matmul %23, %32, %cst_22 {dimension_numbers = #tpu.dot_dimension_numbers<[1], [0], [0], [1], [0, 0, 1, 1], [], []>} : vector<2x128xf32>, vector<128x64xf32>, vector<2x64xf32> -> vector<2x64xf32>
    %34 = arith.addf %31, %33 : vector<2x64xf32>
    %c0_23 = arith.constant 0 : index
    %c0_24 = arith.constant 0 : index
    %35 = vector.load %arg7[%c0_23, %c0_24] : memref<1x64xf32, #tpu.memory_space<vmem>>, vector<1x64xf32>
    %36 = vector.broadcast %35 : vector<1x64xf32> to vector<2x64xf32>
    %37 = arith.addf %34, %36 : vector<2x64xf32>
    %38 = math.tanh %37 : vector<2x64xf32>
    %c0_25 = arith.constant 0 : index
    %c0_26 = arith.constant 0 : index
    %39 = vector.load %arg8[%c0_25, %c0_26] : memref<1x64xf32, #tpu.memory_space<vmem>>, vector<1x64xf32>
    %40 = vector.broadcast %39 : vector<1x64xf32> to vector<2x64xf32>
    %41 = arith.mulf %38, %40 : vector<2x64xf32>
    %cst_27 = arith.constant dense<0.000000e+00> : vector<2xf32>
    %42 = vector.multi_reduction <add>, %41, %cst_27 [1] : vector<2x64xf32> to vector<2xf32>
    %43 = vector.shape_cast %42 : vector<2xf32> to vector<2x1xf32>
    %c0_28 = arith.constant 0 : index
    %c0_29 = arith.constant 0 : index
    %44 = vector.load %arg9[%c0_28, %c0_29] : memref<1x1xf32, #tpu.memory_space<vmem>>, vector<1x1xf32>
    %45 = vector.broadcast %44 : vector<1x1xf32> to vector<2x1xf32>
    %46 = arith.addf %43, %45 : vector<2x1xf32>
    %47 = vector.shape_cast %46 : vector<2x1xf32> to vector<2x1xf32>
    %48 = vector.broadcast %47 : vector<2x1xf32> to vector<2x128xf32>
    %c0_30 = arith.constant 0 : index
    %c0_31 = arith.constant 0 : index
    %49 = vector.load %arg13[%c0_30, %c0_31] : memref<2x128xf32, #tpu.memory_space<vmem>>, vector<2x128xf32>
    tpu.vector_store %arg13[%c0_30, %c0_31], %48 {strides = array<i32>} : memref<2x128xf32, #tpu.memory_space<vmem>>, vector<2x128xf32>,
    %50 = arith.mulf %21, %21 : vector<2x128xf32>
    %cst_32 = arith.constant dense<0.000000e+00> : vector<2xf32>
    %51 = vector.multi_reduction <add>, %50, %cst_32 [1] : vector<2x128xf32> to vector<2xf32>
    %52 = vector.shape_cast %51 : vector<2xf32> to vector<2x1xf32>
    %53 = math.sqrt %52 : vector<2x1xf32>
    %54 = vector.broadcast %53 : vector<2x1xf32> to vector<2x128xf32>
    %55 = arith.divf %21, %54 : vector<2x128xf32>
    %c0_33 = arith.constant 0 : index
    %c0_34 = arith.constant 0 : index
    %56 = vector.load %arg10[%c0_33, %c0_34] : memref<2x128xf32, #tpu.memory_space<vmem>>, vector<2x128xf32>
    tpu.vector_store %arg10[%c0_33, %c0_34], %55 {strides = array<i32>} : memref<2x128xf32, #tpu.memory_space<vmem>>, vector<2x128xf32>,
    %57 = arith.mulf %23, %23 : vector<2x128xf32>
    %cst_35 = arith.constant dense<0.000000e+00> : vector<2xf32>
    %58 = vector.multi_reduction <add>, %57, %cst_35 [1] : vector<2x128xf32> to vector<2xf32>
    %59 = vector.shape_cast %58 : vector<2xf32> to vector<2x1xf32>
    %60 = math.sqrt %59 : vector<2x1xf32>
    %61 = vector.broadcast %60 : vector<2x1xf32> to vector<2x128xf32>
    %62 = arith.divf %23, %61 : vector<2x128xf32>
    %c0_36 = arith.constant 0 : index
    %c0_37 = arith.constant 0 : index
    %63 = vector.load %arg11[%c0_36, %c0_37] : memref<2x128xf32, #tpu.memory_space<vmem>>, vector<2x128xf32>
    tpu.vector_store %arg11[%c0_36, %c0_37], %62 {strides = array<i32>} : memref<2x128xf32, #tpu.memory_space<vmem>>, vector<2x128xf32>,
    return
  }
  func.func @transform_0(%arg0: i32) -> (i32, i32, i32) {
    %c0_i32 = arith.constant 0 : i32
    %c0_i32_0 = arith.constant 0 : i32
    %c0_i32_1 = arith.constant 0 : i32
    return %arg0, %c0_i32, %c0_i32_0 : i32, i32, i32
  }
  func.func @transform_1(%arg0: i32) -> (i32, i32, i32) {
    %c0_i32 = arith.constant 0 : i32
    %c0_i32_0 = arith.constant 0 : i32
    %c0_i32_1 = arith.constant 0 : i32
    return %arg0, %c0_i32, %c0_i32_0 : i32, i32, i32
  }
  func.func @transform_2(%arg0: i32) -> (i32, i32) {
    %c0_i32 = arith.constant 0 : i32
    %c0_i32_0 = arith.constant 0 : i32
    return %arg0, %c0_i32 : i32, i32
  }
  func.func @transform_3(%arg0: i32) -> (i32, i32) {
    %c0_i32 = arith.constant 0 : i32
    %c0_i32_0 = arith.constant 0 : i32
    return %arg0, %c0_i32 : i32, i32
  }
  func.func @transform_4(%arg0: i32) -> (i32, i32) {
    %c0_i32 = arith.constant 0 : i32
    %c0_i32_0 = arith.constant 0 : i32
    %c0_i32_1 = arith.constant 0 : i32
    return %c0_i32, %c0_i32_0 : i32, i32
  }
  func.func @transform_5(%arg0: i32) -> (i32, i32) {
    %c0_i32 = arith.constant 0 : i32
    %c0_i32_0 = arith.constant 0 : i32
    %c0_i32_1 = arith.constant 0 : i32
    return %c0_i32, %c0_i32_0 : i32, i32
  }
  func.func @transform_6(%arg0: i32) -> (i32, i32) {
    %c0_i32 = arith.constant 0 : i32
    %c0_i32_0 = arith.constant 0 : i32
    %c0_i32_1 = arith.constant 0 : i32
    return %c0_i32, %c0_i32_0 : i32, i32
  }
  func.func @transform_7(%arg0: i32) -> (i32, i32) {
    %c0_i32 = arith.constant 0 : i32
    %c0_i32_0 = arith.constant 0 : i32
    %c0_i32_1 = arith.constant 0 : i32
    return %c0_i32, %c0_i32_0 : i32, i32
  }
  func.func @transform_8(%arg0: i32) -> (i32, i32) {
    %c0_i32 = arith.constant 0 : i32
    %c0_i32_0 = arith.constant 0 : i32
    %c0_i32_1 = arith.constant 0 : i32
    return %c0_i32, %c0_i32_0 : i32, i32
  }
  func.func @transform_9(%arg0: i32) -> (i32, i32) {
    %c0_i32 = arith.constant 0 : i32
    %c0_i32_0 = arith.constant 0 : i32
    return %arg0, %c0_i32 : i32, i32
  }
  func.func @transform_10(%arg0: i32) -> (i32, i32) {
    %c0_i32 = arith.constant 0 : i32
    %c0_i32_0 = arith.constant 0 : i32
    return %arg0, %c0_i32 : i32, i32
  }
  func.func @transform_11(%arg0: i32) -> (i32, i32) {
    %c0_i32 = arith.constant 0 : i32
    %c0_i32_0 = arith.constant 0 : i32
    return %arg0, %c0_i32 : i32, i32
  }
  func.func @transform_12(%arg0: i32) -> (i32, i32) {
    %c0_i32 = arith.constant 0 : i32
    %c0_i32_0 = arith.constant 0 : i32
    return %arg0, %c0_i32 : i32, i32
  }
}

</mosaic_0001>

<llo_original>
// kernel: tpu_custom_call.1
$region0: #{tpu_custom_call.1}
  #allocation0 [shape = 'u32[]', space=smem, size = 0x4, offset = 0x4, fixed_abs, tag = 'smem constant byte address 0x4 - core index']
  #allocation1 [shape = 'u32[144,128]{1,0:T(1,128)}', space=vmem, size = 0x12000, scoped, tag = 'internal scratch']
  #allocation2 [shape = 'f32[1,1]{1,0:T(1,128)S(1)}', space=vmem, size = 0x200, scoped, tag = 'scoped memory for tpu_custom_call.1']
  %s0 = inlined_call_operand.vmem [shape: bf16[2,8,128], index: 0, kind: input, shape index: {}]
  %s1 = inlined_call_operand.vmem [shape: bf16[2,8,128], index: 1, kind: input, shape index: {}]
  %s2 = inlined_call_operand.vmem [shape: bf16[2,8], index: 2, kind: input, shape index: {}]
  %s3 = inlined_call_operand.vmem [shape: bf16[2,8], index: 3, kind: input, shape index: {}]
  %s4 = inlined_call_operand.vmem [shape: f32[128,64], index: 4, kind: input, shape index: {}]
  %s5 = inlined_call_operand.vmem [shape: f32[128,64], index: 5, kind: input, shape index: {}]
  %s6 = inlined_call_operand.vmem [shape: f32[1,64], index: 6, kind: input, shape index: {}]
  %s7 = inlined_call_operand.vmem [shape: f32[1,64], index: 7, kind: input, shape index: {}]
  %s8 = inlined_call_operand.<no memory space> [shape: f32[1,1], index: 8, kind: input, shape index: {}]
  %s9 = inlined_call_operand.hbm [shape: f32[2,128], index: 9, kind: output, shape index: {0}]
  %s10 = inlined_call_operand.hbm [shape: f32[2,128], index: 10, kind: output, shape index: {1}]
  %s11 = inlined_call_operand.hbm [shape: f32[2,512], index: 11, kind: output, shape index: {2}]
  %s12 = inlined_call_operand.hbm [shape: f32[2,128], index: 12, kind: output, shape index: {3}]
  %13 = xla_tuple %s9, %s10, %s11, %s12
  %s14 = sld [smem:[#allocation0]]
  $region70: #{tpu_custom_call.1} parent=0
    _
  %s16 = ssub.s32 1, %s14
  %s17 = scalar_select 0, %s16, %s14
  %v18 = vstv %s8
  %19 = vst [vmem:[#allocation2] sm:$0x1] %v18
  $region1: #{tpu_custom_call.1} parent=0
    #allocation3 [shape = 'u8[1024]{0}', space=vmem, size = 0x400, scoped, tag = 'output window, operand 0, single buffered']
    #allocation4 [shape = 's32[1]{0}', space=sflag, size = 0x4, scoped, tag = 'scoped memory for tpu_custom_call.1']
    #allocation5 [shape = 'u8[1024]{0}', space=vmem, size = 0x400, scoped, tag = 'output window, operand 1, single buffered']
    #allocation6 [shape = 's32[1]{0}', space=sflag, size = 0x4, scoped, tag = 'scoped memory for tpu_custom_call.1']
    #allocation7 [shape = 'u8[4096]{0}', space=vmem, size = 0x1000, scoped, tag = 'output window, operand 2, single buffered']
    #allocation8 [shape = 'u8[1024]{0}', space=vmem, size = 0x400, scoped, tag = 'output window, operand 3, single buffered']
    #allocation9 [shape = 's32[1]{0}', space=sflag, size = 0x4, scoped, tag = 'scoped memory for tpu_custom_call.1']
    %20 = vsyncpa [#allocation4], 0
    %21 = vsyncpa [#allocation6], 0
    %22 = vsyncpa [#allocation9], 0
    // Predicated region
    $region2: #{tpu_custom_call.1} parent=1 // pred_check
      _
    $region3: #{tpu_custom_call.1} parent=1 // pred_check_branch
      %24 = sbr.rel (0) target = $region5
    $region4: #{tpu_custom_call.1} parent=1 // pred_region
      _
    $region5: #{tpu_custom_call.1} parent=1 // pred_fallthru
      _
    // Predicated region
    $region6: #{tpu_custom_call.1} parent=1 // pred_check
      _
    $region7: #{tpu_custom_call.1} parent=1 // pred_check_branch
      %26 = sbr.rel (0) target = $region9
    $region8: #{tpu_custom_call.1} parent=1 // pred_region
      _
    $region9: #{tpu_custom_call.1} parent=1 // pred_fallthru
      _
    // Predicated region
    $region10: #{tpu_custom_call.1} parent=1 // pred_check
      _
    $region11: #{tpu_custom_call.1} parent=1 // pred_check_branch
      %28 = sbr.rel (0) target = $region13
    $region12: #{tpu_custom_call.1} parent=1 // pred_region
      _
    $region13: #{tpu_custom_call.1} parent=1 // pred_fallthru
      _
    // Predicated region
    $region14: #{tpu_custom_call.1} parent=1 // pred_check
      _
    $region15: #{tpu_custom_call.1} parent=1 // pred_check_branch
      %30 = sbr.rel (0) target = $region17
    $region16: #{tpu_custom_call.1} parent=1 // pred_region
      _
    $region17: #{tpu_custom_call.1} parent=1 // pred_fallthru
      _
    // Predicated region
    $region18: #{tpu_custom_call.1} parent=1 // pred_check
      _
    $region19: #{tpu_custom_call.1} parent=1 // pred_check_branch
      %32 = sbr.rel (0) target = $region21
    $region20: #{tpu_custom_call.1} parent=1 // pred_region
      _
    $region21: #{tpu_custom_call.1} parent=1 // pred_fallthru
      _
    // Predicated region
    $region22: #{tpu_custom_call.1} parent=1 // pred_check
      _
    $region23: #{tpu_custom_call.1} parent=1 // pred_check_branch
      %34 = sbr.rel (0) target = $region25
    $region24: #{tpu_custom_call.1} parent=1 // pred_region
      _
    $region25: #{tpu_custom_call.1} parent=1 // pred_fallthru
      _
    // Predicated region
    $region26: #{tpu_custom_call.1} parent=1 // pred_check
      _
    $region27: #{tpu_custom_call.1} parent=1 // pred_check_branch
      %36 = sbr.rel (0) target = $region29
    $region28: #{tpu_custom_call.1} parent=1 // pred_region
      _
    $region29: #{tpu_custom_call.1} parent=1 // pred_fallthru
      _
    // Predicated region
    $region30: #{tpu_custom_call.1} parent=1 // pred_check
      _
    $region31: #{tpu_custom_call.1} parent=1 // pred_check_branch
      %38 = sbr.rel (0) target = $region33
    $region32: #{tpu_custom_call.1} parent=1 // pred_region
      _
    $region33: #{tpu_custom_call.1} parent=1 // pred_fallthru
      _
    // Predicated region
    $region34: #{tpu_custom_call.1} parent=1 // pred_check
      _
    $region35: #{tpu_custom_call.1} parent=1 // pred_check_branch
      %40 = sbr.rel (0) target = $region37
    $region36: #{tpu_custom_call.1} parent=1 // pred_region
      _
    $region37: #{tpu_custom_call.1} parent=1 // pred_fallthru
      _
    %v41 = vld [vmem:[%s2] sm:$0x1]
    %v42 = vld [vmem:[%s3] sm:$0x1]
    %v43 = vld [vmem:[%s0] sm:$0xf]
    %v44 = vld [vmem:[%s0 + $0x4] sm:$0xf]
    %v46 = vpack.i.b16 %v41, %v41
    %v48 = vlaneseq
    %v49 = vshrl.u32 %v48, 7
    %v50 = vsub.s32 0, %v49
    %v51 = vrot.slane %v46, %v50
    %53 = vbcast.lane.c.b16.xlu0 %v51, 256
    %v54 = vpop.permute.xlu0 %53
    %v55 = vshrl.u32 %v41, 16
    %v56 = vpack.i.b16 %v55, %v55
    %v58 = vlaneseq
    %v59 = vshrl.u32 %v58, 7
    %v60 = vsub.s32 0, %v59
    %v61 = vrot.slane %v56, %v60
    %63 = vbcast.lane.c.b16.xlu0 %v61, 256
    %v64 = vpop.permute.xlu0 %63
    %v65 = vmul.bf16 %v43, %v54
    %v66 = vmul.bf16 %v44, %v64
    %v67 = vunpack.c.l.bf16 %v65
    %v68 = vunpack.c.l.bf16 %v66
    %v69 = vrot.slane %v67, 4
    %v70 = vadd.f32 %v67, %v69
    %v71 = vrot.slane %v70, 2
    %v72 = vadd.f32 %v70, %v71
    %v73 = vrot.slane %v72, 1
    %v74 = vadd.f32 %v72, %v73
    %v75 = vrot.slane %v68, 4
    %v76 = vadd.f32 %v68, %v75
    %v77 = vrot.slane %v76, 2
    %v78 = vadd.f32 %v76, %v77
    %v79 = vrot.slane %v78, 1
    %v80 = vadd.f32 %v78, %v79
    %v81 = vld [vmem:[%s1] sm:$0xf]
    %v82 = vld [vmem:[%s1 + $0x4] sm:$0xf]
    %v84 = vpack.i.b16 %v42, %v42
    %v86 = vlaneseq
    %v87 = vshrl.u32 %v86, 7
    %v88 = vsub.s32 0, %v87
    %v89 = vrot.slane %v84, %v88
    %91 = vbcast.lane.c.b16.xlu0 %v89, 256
    %v92 = vpop.permute.xlu0 %91
    %v93 = vshrl.u32 %v42, 16
    %v94 = vpack.i.b16 %v93, %v93
    %v96 = vlaneseq
    %v97 = vshrl.u32 %v96, 7
    %v98 = vsub.s32 0, %v97
    %v99 = vrot.slane %v94, %v98
    %101 = vbcast.lane.c.b16.xlu0 %v99, 256
    %v102 = vpop.permute.xlu0 %101
    %v103 = vmul.bf16 %v81, %v92
    %v104 = vmul.bf16 %v82, %v102
    %v105 = vunpack.c.l.bf16 %v103
    %v106 = vunpack.c.l.bf16 %v104
    %v107 = vrot.slane %v105, 4
    %v108 = vadd.f32 %v105, %v107
    %v109 = vrot.slane %v108, 2
    %v110 = vadd.f32 %v108, %v109
    %v111 = vrot.slane %v110, 1
    %v112 = vadd.f32 %v110, %v111
    %v113 = vrot.slane %v106, 4
    %v114 = vadd.f32 %v106, %v113
    %v115 = vrot.slane %v114, 2
    %v116 = vadd.f32 %v114, %v115
    %v117 = vrot.slane %v116, 1
    %v118 = vadd.f32 %v116, %v117
    %v119 = vunpack.c.l.bf16 %v41
    %vm120 = vcmask 58368
    %v121 = vsel %vm120, %v119, 0.0
    %122 = vadd.xlane.f32.xlu0 %v121
    %v123 = vpop.xlane.xlu0 %122
    %v124 = vunpack.c.l.bf16 %v42
    %v125 = vsel %vm120, %v124, 0.0
    %126 = vadd.xlane.f32.xlu0 %v125
    %v127 = vpop.xlane.xlu0 %126
    %v129 = vrot.slane %v123, 1
    %v132 = vrcp.pop %v123
    %v133 = vmul.f32 %v74, %v132
    %v134 = vrcp.pop %v129
    %v135 = vmul.f32 %v80, %v134
    %v137 = vrot.slane %v127, 1
    %v140 = vrcp.pop %v127
    %v141 = vmul.f32 %v112, %v140
    %v142 = vrcp.pop %v137
    %v143 = vmul.f32 %v118, %v142
    %v147 = vunpack.c.l.s4 1983009808
    %v148 = vunpack.c.0.s8 %v147
    %v149 = vlaneseq
    %v150 = vshrl.u32 %v149, 7
    %v151 = vsub.s32 %v148, %v150
    %v152 = vrot.slane %v133, %v151
    %v154 = vunpack.c.l.s4 1983009808
    %v155 = vunpack.c.0.s8 %v154
    %v156 = vlaneseq
    %v157 = vshrl.u32 %v156, 7
    %v158 = vsub.s32 %v155, %v157
    %v159 = vrot.slane %v135, %v158
    %vm160 = vcmask 1044484
    %v161 = vsel %vm160, %v152, %v152
    %vm162 = vcmask 1046534
    %v163 = vsel %vm162, %v152, %v161
    %v164 = vrot.slane %v159, 7
    %vm165 = vcmask 1041409
    %v166 = vsel %vm165, %v164, %v163
    %vm167 = vcmask 1043459
    %v168 = vsel %vm167, %v164, %v166
    %vm169 = vcmask 1045509
    %v170 = vsel %vm169, %v164, %v168
    %vm171 = vcmask 1047559
    %v172 = vsel %vm171, %v164, %v170
    %174 = vst [vmem:[#allocation7] sm:$0x3] %v172
    %v178 = vunpack.c.l.s4 1983009808
    %v179 = vunpack.c.0.s8 %v178
    %v180 = vlaneseq
    %v181 = vshrl.u32 %v180, 7
    %v182 = vsub.s32 %v179, %v181
    %v183 = vrot.slane %v141, %v182
    %v185 = vunpack.c.l.s4 1983009808
    %v186 = vunpack.c.0.s8 %v185
    %v187 = vlaneseq
    %v188 = vshrl.u32 %v187, 7
    %v189 = vsub.s32 %v186, %v188
    %v190 = vrot.slane %v143, %v189
    %v191 = vsel %vm160, %v183, %v183
    %v192 = vsel %vm162, %v183, %v191
    %v193 = vrot.slane %v190, 7
    %v194 = vsel %vm165, %v193, %v192
    %v195 = vsel %vm167, %v193, %v194
    %v196 = vsel %vm169, %v193, %v195
    %v197 = vsel %vm171, %v193, %v196
    %199 = vst [vmem:[#allocation7 + $0x2] sm:$0x3] %v197
    %v200 = vsub.f32 %v141, %v133
    %v201 = vsub.f32 %v143, %v135
    %v205 = vunpack.c.l.s4 1983009808
    %v206 = vunpack.c.0.s8 %v205
    %v207 = vlaneseq
    %v208 = vshrl.u32 %v207, 7
    %v209 = vsub.s32 %v206, %v208
    %v210 = vrot.slane %v200, %v209
    %v212 = vunpack.c.l.s4 1983009808
    %v213 = vunpack.c.0.s8 %v212
    %v214 = vlaneseq
    %v215 = vshrl.u32 %v214, 7
    %v216 = vsub.s32 %v213, %v215
    %v217 = vrot.slane %v201, %v216
    %v218 = vsel %vm160, %v210, %v210
    %v219 = vsel %vm162, %v210, %v218
    %v220 = vrot.slane %v217, 7
    %v221 = vsel %vm165, %v220, %v219
    %v222 = vsel %vm167, %v220, %v221
    %v223 = vsel %vm169, %v220, %v222
    %v224 = vsel %vm171, %v220, %v223
    %226 = vst [vmem:[#allocation7 + $0x4] sm:$0x3] %v224
    %v227 = vadd.f32 %v141, %v133
    %v228 = vadd.f32 %v143, %v135
    %v232 = vunpack.c.l.s4 1983009808
    %v233 = vunpack.c.0.s8 %v232
    %v234 = vlaneseq
    %v235 = vshrl.u32 %v234, 7
    %v236 = vsub.s32 %v233, %v235
    %v237 = vrot.slane %v227, %v236
    %v239 = vunpack.c.l.s4 1983009808
    %v240 = vunpack.c.0.s8 %v239
    %v241 = vlaneseq
    %v242 = vshrl.u32 %v241, 7
    %v243 = vsub.s32 %v240, %v242
    %v244 = vrot.slane %v228, %v243
    %v245 = vsel %vm160, %v237, %v237
    %v246 = vsel %vm162, %v237, %v245
    %v247 = vrot.slane %v244, 7
    %v248 = vsel %vm165, %v247, %v246
    %v249 = vsel %vm167, %v247, %v248
    %v250 = vsel %vm169, %v247, %v249
    %v251 = vsel %vm171, %v247, %v250
    %253 = vst [vmem:[#allocation7 + $0x6] sm:$0x3] %v251
    %v254 = vld [vmem:[%s4] sm:$0xff]
    %v255 = vld [vmem:[%s4 + $0x8] sm:$0xff]
    %v256 = vld [vmem:[%s4 + $0x10] sm:$0xff]
    %v257 = vld [vmem:[%s4 + $0x18] sm:$0xff]
    %v258 = vld [vmem:[%s4 + $0x20] sm:$0xff]
    %v259 = vld [vmem:[%s4 + $0x28] sm:$0xff]
    %v260 = vld [vmem:[%s4 + $0x30] sm:$0xff]
    %v261 = vld [vmem:[%s4 + $0x38] sm:$0xff]
    %v262 = vld [vmem:[%s4 + $0x40] sm:$0xff]
    %v263 = vld [vmem:[%s4 + $0x48] sm:$0xff]
    %v264 = vld [vmem:[%s4 + $0x50] sm:$0xff]
    %v265 = vld [vmem:[%s4 + $0x58] sm:$0xff]
    %v266 = vld [vmem:[%s4 + $0x60] sm:$0xff]
    %v267 = vld [vmem:[%s4 + $0x68] sm:$0xff]
    %v268 = vld [vmem:[%s4 + $0x70] sm:$0xff]
    %v269 = vld [vmem:[%s4 + $0x78] sm:$0xff]
    %v270 = vld [vmem:[%s5] sm:$0xff]
    %v271 = vld [vmem:[%s5 + $0x8] sm:$0xff]
    %v272 = vld [vmem:[%s5 + $0x10] sm:$0xff]
    %v273 = vld [vmem:[%s5 + $0x18] sm:$0xff]
    %v274 = vld [vmem:[%s5 + $0x20] sm:$0xff]
    %v275 = vld [vmem:[%s5 + $0x28] sm:$0xff]
    %v276 = vld [vmem:[%s5 + $0x30] sm:$0xff]
    %v277 = vld [vmem:[%s5 + $0x38] sm:$0xff]
    %v278 = vld [vmem:[%s5 + $0x40] sm:$0xff]
    %v279 = vld [vmem:[%s5 + $0x48] sm:$0xff]
    %v280 = vld [vmem:[%s5 + $0x50] sm:$0xff]
    %v281 = vld [vmem:[%s5 + $0x58] sm:$0xff]
    %v282 = vld [vmem:[%s5 + $0x60] sm:$0xff]
    %v283 = vld [vmem:[%s5 + $0x68] sm:$0xff]
    %v284 = vld [vmem:[%s5 + $0x70] sm:$0xff]
    %v285 = vld [vmem:[%s5 + $0x78] sm:$0xff]
    %v286 = vrot.slane %v143, 7
    %v287 = vsel %vm165, %v286, %v141
    %289 = vmatprep.subr.mxu0 0.0
    %290 = vmatpush1.msra.mxu0 %v285
    %291 = vmatprep.subr.mxu0 0.0
    %292 = vmatpush1.msra.mxu0 %v284
    %293 = vmatprep.subr.mxu0 0.0
    %294 = vmatpush1.msra.mxu0 %v283
    %295 = vmatprep.subr.mxu0 0.0
    %296 = vmatpush1.msra.mxu0 %v282
    %297 = vmatprep.subr.mxu0 0.0
    %298 = vmatpush1.msra.mxu0 %v281
    %299 = vmatprep.subr.mxu0 0.0
    %300 = vmatpush1.msra.mxu0 %v280
    %301 = vmatprep.subr.mxu0 0.0
    %302 = vmatpush1.msra.mxu0 %v279
    %303 = vmatprep.subr.mxu0 0.0
    %304 = vmatpush1.msra.mxu0 %v278
    %305 = vmatprep.subr.mxu0 0.0
    %306 = vmatpush1.msra.mxu0 %v277
    %307 = vmatprep.subr.mxu0 0.0
    %308 = vmatpush1.msra.mxu0 %v276
    %309 = vmatprep.subr.mxu0 0.0
    %310 = vmatpush1.msra.mxu0 %v275
    %311 = vmatprep.subr.mxu0 0.0
    %312 = vmatpush1.msra.mxu0 %v274
    %313 = vmatprep.subr.mxu0 0.0
    %314 = vmatpush1.msra.mxu0 %v273
    %315 = vmatprep.subr.mxu0 0.0
    %316 = vmatpush1.msra.mxu0 %v272
    %317 = vmatprep.subr.mxu0 0.0
    %318 = vmatpush1.msra.mxu0 %v271
    %319 = vmatprep.subr.mxu0 0.0
    %320 = vmatpush1.msra.mxu0 %v270
    %321 = vmatprep.subr.mxu0 0.0
    %322 = vmatpush2.msra.mxu0 0.0
    %323 = vmatprep.subr.mxu0 0.0
    %324 = vmatpush2.msra.mxu0 0.0
    %325 = vmatprep.subr.mxu0 0.0
    %326 = vmatpush2.msra.mxu0 0.0
    %327 = vmatprep.subr.mxu0 0.0
    %328 = vmatpush2.msra.mxu0 0.0
    %329 = vmatprep.subr.mxu0 0.0
    %330 = vmatpush2.msra.mxu0 0.0
    %331 = vmatprep.subr.mxu0 0.0
    %332 = vmatpush2.msra.mxu0 0.0
    %333 = vmatprep.subr.mxu0 0.0
    %334 = vmatpush2.msra.mxu0 0.0
    %335 = vmatprep.subr.mxu0 0.0
    %336 = vmatpush2.msra.mxu0 0.0
    %337 = vmatprep.subr.mxu0 0.0
    %338 = vmatpush2.msra.mxu0 0.0
    %339 = vmatprep.subr.mxu0 0.0
    %340 = vmatpush2.msra.mxu0 0.0
    %341 = vmatprep.subr.mxu0 0.0
    %342 = vmatpush2.msra.mxu0 0.0
    %343 = vmatprep.subr.mxu0 0.0
    %344 = vmatpush2.msra.mxu0 0.0
    %345 = vmatprep.subr.mxu0 0.0
    %346 = vmatpush2.msra.mxu0 0.0
    %347 = vmatprep.subr.mxu0 0.0
    %348 = vmatpush2.msra.mxu0 0.0
    %349 = vmatprep.subr.mxu0 0.0
    %350 = vmatpush2.msra.mxu0 0.0
    %351 = vmatprep.subr.mxu0 0.0
    %352 = vmatpush2.msra.mxu0 0.0
    %353 = vmatprep.mubr.f32.mxu0 0.0
    %354 = vmatmul.mubr.f32.gmra.mxu0 %v287
    %v355 = vpop.f32.mrf.mxu0
    %v356 = vadd.f32 0.0, %v355
    %v357 = vpop.f32.mrf.mxu0
    %358 = vdwg.mxu0
    %v359 = vrot.slane %v135, 7
    %v360 = vsel %vm165, %v359, %v133
    %362 = vmatprep.subr.mxu0 0.0
    %363 = vmatpush1.msra.mxu0 %v269
    %364 = vmatprep.subr.mxu0 0.0
    %365 = vmatpush1.msra.mxu0 %v268
    %366 = vmatprep.subr.mxu0 0.0
    %367 = vmatpush1.msra.mxu0 %v267
    %368 = vmatprep.subr.mxu0 0.0
    %369 = vmatpush1.msra.mxu0 %v266
    %370 = vmatprep.subr.mxu0 0.0
    %371 = vmatpush1.msra.mxu0 %v265
    %372 = vmatprep.subr.mxu0 0.0
    %373 = vmatpush1.msra.mxu0 %v264
    %374 = vmatprep.subr.mxu0 0.0
    %375 = vmatpush1.msra.mxu0 %v263
    %376 = vmatprep.subr.mxu0 0.0
    %377 = vmatpush1.msra.mxu0 %v262
    %378 = vmatprep.subr.mxu0 0.0
    %379 = vmatpush1.msra.mxu0 %v261
    %380 = vmatprep.subr.mxu0 0.0
    %381 = vmatpush1.msra.mxu0 %v260
    %382 = vmatprep.subr.mxu0 0.0
    %383 = vmatpush1.msra.mxu0 %v259
    %384 = vmatprep.subr.mxu0 0.0
    %385 = vmatpush1.msra.mxu0 %v258
    %386 = vmatprep.subr.mxu0 0.0
    %387 = vmatpush1.msra.mxu0 %v257
    %388 = vmatprep.subr.mxu0 0.0
    %389 = vmatpush1.msra.mxu0 %v256
    %390 = vmatprep.subr.mxu0 0.0
    %391 = vmatpush1.msra.mxu0 %v255
    %392 = vmatprep.subr.mxu0 0.0
    %393 = vmatpush1.msra.mxu0 %v254
    %394 = vmatprep.subr.mxu0 0.0
    %395 = vmatpush2.msra.mxu0 0.0
    %396 = vmatprep.subr.mxu0 0.0
    %397 = vmatpush2.msra.mxu0 0.0
    %398 = vmatprep.subr.mxu0 0.0
    %399 = vmatpush2.msra.mxu0 0.0
    %400 = vmatprep.subr.mxu0 0.0
    %401 = vmatpush2.msra.mxu0 0.0
    %402 = vmatprep.subr.mxu0 0.0
    %403 = vmatpush2.msra.mxu0 0.0
    %404 = vmatprep.subr.mxu0 0.0
    %405 = vmatpush2.msra.mxu0 0.0
    %406 = vmatprep.subr.mxu0 0.0
    %407 = vmatpush2.msra.mxu0 0.0
    %408 = vmatprep.subr.mxu0 0.0
    %409 = vmatpush2.msra.mxu0 0.0
    %410 = vmatprep.subr.mxu0 0.0
    %411 = vmatpush2.msra.mxu0 0.0
    %412 = vmatprep.subr.mxu0 0.0
    %413 = vmatpush2.msra.mxu0 0.0
    %414 = vmatprep.subr.mxu0 0.0
    %415 = vmatpush2.msra.mxu0 0.0
    %416 = vmatprep.subr.mxu0 0.0
    %417 = vmatpush2.msra.mxu0 0.0
    %418 = vmatprep.subr.mxu0 0.0
    %419 = vmatpush2.msra.mxu0 0.0
    %420 = vmatprep.subr.mxu0 0.0
    %421 = vmatpush2.msra.mxu0 0.0
    %422 = vmatprep.subr.mxu0 0.0
    %423 = vmatpush2.msra.mxu0 0.0
    %424 = vmatprep.subr.mxu0 0.0
    %425 = vmatpush2.msra.mxu0 0.0
    %426 = vmatprep.mubr.f32.mxu0 0.0
    %427 = vmatmul.mubr.f32.gmra.mxu0 %v360
    %v428 = vpop.f32.mrf.mxu0
    %v429 = vadd.f32 %v356, %v428
    %v430 = vpop.f32.mrf.mxu0
    %431 = vdwg.mxu0
    %v432 = vld [vmem:[%s6] sm:$0x1]
    %v434 = vlaneseq
    %v435 = vshrl.u32 %v434, 7
    %v436 = vsub.s32 0, %v435
    %v437 = vrot.slane %v432, %v436
    %v439 = vadd.f32 %v429, %v437
    %v440 = vtanh.pop %v439
    %v441 = vld [vmem:[%s7] sm:$0x1]
    %v443 = vlaneseq
    %v444 = vshrl.u32 %v443, 7
    %v445 = vsub.s32 0, %v444
    %v446 = vrot.slane %v441, %v445
    %v448 = vmul.f32 %v440, %v446
    %vm449 = vcmask 517120
    %v450 = vsel %vm449, %v448, 0.0
    %451 = vadd.xlane.f32.xlu0 %v450
    %v452 = vpop.xlane.xlu0 %451
    %v453 = vld [vmem:[#allocation2] sm:$0x1]
    %v455 = vlaneseq
    %v456 = vshrl.u32 %v455, 7
    %v457 = vsub.s32 0, %v456
    %v458 = vrot.slane %v453, %v457
    %v460 = vadd.f32 %v452, %v458
    %462 = vset.pattern.permute.xlu0 0
    %463 = vperm.xlu0 %462, %v460
    %v464 = vpop.permute.xlu0 %463
    %466 = vst [vmem:[#allocation8] sm:$0x3] %v464
    %v467 = vmul.f32 %v133, %v133
    %v468 = vmul.f32 %v135, %v135
    %v471 = vrot.slane %v468, 7
    %v472 = vsel %vm165, %v471, %v467
    %vm474 = vcmask 1041408
    %v475 = vsel %vm474, %v472, 0.0
    %476 = vadd.xlane.f32.xlu0 %v475
    %v477 = vpop.xlane.xlu0 %476
    %v478 = vrsqrt.pop %v477
    %v479 = vmul.f32 %v477, %v478
    %vm480 = vcmp.eq.f32.partialorder %v477, inf
    %v481 = vsel %vm480, %v477, %v479
    %vm482 = vcmp.eq.f32.partialorder %v477, 0.0
    %v483 = vand.u32 %v477, 2147483648
    %v484 = vsel %vm482, %v483, %v481
    %v486 = vrot.slane %v484, 1
    %v489 = vrcp.pop %v484
    %v490 = vmul.f32 %v133, %v489
    %v491 = vrcp.pop %v486
    %v492 = vmul.f32 %v135, %v491
    %v495 = vrot.slane %v492, 7
    %v496 = vsel %vm165, %v495, %v490
    %498 = vst [vmem:[#allocation3] sm:$0x3] %v496
    %v499 = vmul.f32 %v141, %v141
    %v500 = vmul.f32 %v143, %v143
    %v503 = vrot.slane %v500, 7
    %v504 = vsel %vm165, %v503, %v499
    %v506 = vsel %vm474, %v504, 0.0
    %507 = vadd.xlane.f32.xlu0 %v506
    %v508 = vpop.xlane.xlu0 %507
    %v509 = vrsqrt.pop %v508
    %v510 = vmul.f32 %v508, %v509
    %vm511 = vcmp.eq.f32.partialorder %v508, inf
    %v512 = vsel %vm511, %v508, %v510
    %vm513 = vcmp.eq.f32.partialorder %v508, 0.0
    %v514 = vand.u32 %v508, 2147483648
    %v515 = vsel %vm513, %v514, %v512
    %v517 = vrot.slane %v515, 1
    %v520 = vrcp.pop %v515
    %v521 = vmul.f32 %v141, %v520
    %v522 = vrcp.pop %v517
    %v523 = vmul.f32 %v143, %v522
    %v526 = vrot.slane %v523, 7
    %v527 = vsel %vm165, %v526, %v521
    %529 = vst [vmem:[#allocation5] sm:$0x3] %v527
    // Predicated region
    $region38: #{tpu_custom_call.1} parent=1 // pred_check
      _
    $region39: #{tpu_custom_call.1} parent=1 // pred_check_branch
      %531 = sbr.rel (0) target = $region41
    $region40: #{tpu_custom_call.1} parent=1 // pred_region
      %s533 = ssub.s32 32, 32
      %534 = vsyncadd [#allocation4], %s533
      %s536 = sshll.u32 [#allocation3], 4
      %s537 = int_to_ptr.vmem [resolvable:$true] %s536
      %539 = dma.vmem_to_hbm [thread:$0]  %s537, 32, %s9, [#allocation4]
    $region41: #{tpu_custom_call.1} parent=1 // pred_fallthru
      _
    // Predicated region
    $region42: #{tpu_custom_call.1} parent=1 // pred_check
      _
    $region43: #{tpu_custom_call.1} parent=1 // pred_check_branch
      %541 = sbr.rel (0) target = $region45
    $region44: #{tpu_custom_call.1} parent=1 // pred_region
      %s543 = ssub.s32 32, 32
      %544 = vsyncadd [#allocation6], %s543
      %s546 = sshll.u32 [#allocation5], 4
      %s547 = int_to_ptr.vmem [resolvable:$true] %s546
      %549 = dma.vmem_to_hbm [thread:$0]  %s547, 32, %s10, [#allocation6]
    $region45: #{tpu_custom_call.1} parent=1 // pred_fallthru
      _
    // Predicated region
    $region46: #{tpu_custom_call.1} parent=1 // pred_check
      _
    $region47: #{tpu_custom_call.1} parent=1 // pred_check_branch
      %551 = sbr.rel (0) target = $region49
    $region48: #{tpu_custom_call.1} parent=1 // pred_region
      %s553 = ssub.s32 128, 128
      %554 = vsyncadd [#allocation6], %s553
      %s556 = sshll.u32 [#allocation7], 4
      %s557 = int_to_ptr.vmem [resolvable:$true] %s556
      %559 = dma.vmem_to_hbm [thread:$0]  %s557, 128, %s11, [#allocation6]
    $region49: #{tpu_custom_call.1} parent=1 // pred_fallthru
      _
    // Predicated region
    $region50: #{tpu_custom_call.1} parent=1 // pred_check
      _
    $region51: #{tpu_custom_call.1} parent=1 // pred_check_branch
      %561 = sbr.rel (0) target = $region53
    $region52: #{tpu_custom_call.1} parent=1 // pred_region
      %s563 = ssub.s32 32, 32
      %564 = vsyncadd [#allocation9], %s563
      %s566 = sshll.u32 [#allocation8], 4
      %s567 = int_to_ptr.vmem [resolvable:$true] %s566
      %569 = dma.vmem_to_hbm [thread:$0]  %s567, 32, %s12, [#allocation9]
    $region53: #{tpu_custom_call.1} parent=1 // pred_fallthru
      _
    // Predicated region
    $region54: #{tpu_custom_call.1} parent=1 // pred_check
      _
    $region55: #{tpu_custom_call.1} parent=1 // pred_check_branch
      %571 = sbr.rel (0) target = $region57
    $region56: #{tpu_custom_call.1} parent=1 // pred_region
      %572 = dma.done [#allocation4], 32
    $region57: #{tpu_custom_call.1} parent=1 // pred_fallthru
      _
    // Predicated region
    $region58: #{tpu_custom_call.1} parent=1 // pred_check
      _
    $region59: #{tpu_custom_call.1} parent=1 // pred_check_branch
      %574 = sbr.rel (0) target = $region61
    $region60: #{tpu_custom_call.1} parent=1 // pred_region
      %575 = dma.done [#allocation6], 32
    $region61: #{tpu_custom_call.1} parent=1 // pred_fallthru
      _
    // Predicated region
    $region62: #{tpu_custom_call.1} parent=1 // pred_check
      _
    $region63: #{tpu_custom_call.1} parent=1 // pred_check_branch
      %577 = sbr.rel (0) target = $region65
    $region64: #{tpu_custom_call.1} parent=1 // pred_region
      %578 = dma.done [#allocation6], 128
    $region65: #{tpu_custom_call.1} parent=1 // pred_fallthru
      _
    // Predicated region
    $region66: #{tpu_custom_call.1} parent=1 // pred_check
      _
    $region67: #{tpu_custom_call.1} parent=1 // pred_check_branch
      %580 = sbr.rel (0) target = $region69
    $region68: #{tpu_custom_call.1} parent=1 // pred_region
      %581 = dma.done [#allocation9], 32
    $region69: #{tpu_custom_call.1} parent=1 // pred_fallthru
      _
    %582 = vsyncpa [#allocation4], 1
    %583 = vsyncpa [#allocation6], 1
    %584 = vsyncpa [#allocation9], 1

</llo_original>
